<compile_context>
chip_gen: v7x
topology: tpu7x:2x2x1
jax: 0.10.0
libtpu: 0.0.40
codegen_flags: <defaults>
</compile_context>

<pallas_src>
import jax
import jax.numpy as jnp
from jax.experimental import pallas as pl
from jax.experimental.pallas import tpu as pltpu


def _attention_pooling_kernel(x_ref, w_ref, b_ref, pooled_ref, *aw_refs):
    # x_ref:      (TB, S, Dp) VMEM tile (TB batch rows per grid step)
    # w_ref:      (1, Dp)     f32 attention Linear weight (zero-padded past D)
    # b_ref:      (1, 1)      f32 attention Linear bias, in SMEM
    # pooled_ref: (TB, Dp)    pooled output tile (lane-dense)
    # aw_refs:    optional ((TB, S),) attention-weight output tile (lane-dense)
    x = x_ref[...]
    xf = x.astype(jnp.float32)                      # f32 math regardless of input dtype
    w = w_ref[...].astype(jnp.float32)              # (1, Dp)
    b = b_ref[0, 0]                                 # scalar from SMEM

    # scores = x @ w^T + b, computed as a lane reduction over Dp -> (TB, S)
    scores = jnp.sum(xf * w, axis=-1) + b           # (1, Dp) broadcasts over (TB, S, Dp)

    # numerically stable softmax over the sequence axis (last / lane axis here)
    m = jnp.max(scores, axis=-1, keepdims=True)     # (TB, 1)
    e = jnp.exp(scores - m)                         # (TB, S)
    # exact divide (not approx reciprocal) so returned weights hold 1e-5 tolerance
    attn = e / jnp.sum(e, axis=-1, keepdims=True)   # (TB, S), f32

    # weighted pool over the sequence axis -> (TB, Dp)
    # (memory-bound kernel: elementwise multiply + sublane reduce is sufficient here)
    pooled = jnp.sum(xf * attn[:, :, None], axis=1)

    pooled_ref[...] = pooled.astype(pooled_ref.dtype)
    if aw_refs:
        aw_refs[0][...] = attn.astype(aw_refs[0].dtype)


def _choose_batch_tile(B, S, Dp, itemsize, target_bytes=2 << 20):
    """Largest batch tile (divisor of B) whose x tile stays around target_bytes."""
    rows = int(max(1, target_bytes // (S * Dp * itemsize)))
    if rows >= B:
        return B
    # prefer a multiple of 8 so the (TB, S) / (TB, Dp) output blocks tile sublanes cleanly
    for tb in range(rows, 0, -1):
        if B % tb == 0 and tb % 8 == 0:
            return tb
    for tb in range(rows, 0, -1):
        if B % tb == 0:
            return tb
    return 1


def attention_pooling(x, w, b, return_weights=False):
    """x: (B, S, D); w: (1, D) Linear weight; b: (1,) Linear bias."""
    B, S, D = x.shape
    Dp = pl.cdiv(D, 128) * 128                      # pad d_model to full 128-lane vregs
    itemsize = jnp.dtype(x.dtype).itemsize

    if Dp != D:
        x_p = jnp.pad(x, ((0, 0), (0, 0), (0, Dp - D)))
        w_p = jnp.pad(w.reshape(1, D), ((0, 0), (0, Dp - D)))
    else:
        x_p = x
        w_p = w.reshape(1, D)
    w_p = w_p.astype(jnp.float32)
    b_sm = jnp.asarray(b, dtype=jnp.float32).reshape(1, 1)

    TB = _choose_batch_tile(B, S, Dp, itemsize)
    grid = (B // TB,)

    # VMEM budget: double-buffered x tile + double-buffered outputs + headroom.
    x_tile_bytes = TB * S * Dp * itemsize
    out_tile_bytes = TB * (Dp + S) * itemsize
    vmem_limit = int(min(max(2 * x_tile_bytes + 2 * out_tile_bytes + (8 << 20),
                             16 << 20), 64 << 20))

    in_specs = [
        pl.BlockSpec((TB, S, Dp), lambda i: (i, 0, 0)),
        pl.BlockSpec((1, Dp), lambda i: (0, 0)),
        pl.BlockSpec(memory_space=pltpu.MemorySpace.SMEM),   # scalar bias in SMEM
    ]
    pooled_spec = pl.BlockSpec((TB, Dp), lambda i: (i, 0))
    pooled_shape = jax.ShapeDtypeStruct((B, Dp), x.dtype)

    if return_weights:
        out_shape = (pooled_shape, jax.ShapeDtypeStruct((B, S), x.dtype))
        out_specs = (pooled_spec, pl.BlockSpec((TB, S), lambda i: (i, 0)))
    else:
        out_shape = pooled_shape
        out_specs = pooled_spec

    out = pl.pallas_call(
        _attention_pooling_kernel,
        out_shape=out_shape,
        grid=grid,
        in_specs=in_specs,
        out_specs=out_specs,
        compiler_params=pltpu.CompilerParams(
            dimension_semantics=("parallel",),
            vmem_limit_bytes=vmem_limit,
        ),
    )(x_p, w_p, b_sm)

    # TODO(synk): for very long sequences (S*Dp tile > VMEM budget) add an S-tiled
    # online-softmax path; the single-shot path here assumes one (TB, S, Dp) tile fits.
    if return_weights:
        pooled, aw = out
        return pooled[:, :D], aw.reshape(B, S, 1)
    return out[:, :D]


def attention_pooling_ref(x, w, b):
    scores = jnp.einsum("bsd,od->bso", x, w) + b            # (B, S, 1)
    attn = jax.nn.softmax(scores, axis=1)
    pooled = jnp.sum(x * attn, axis=1)
    return pooled, attn


if __name__ == "__main__":
    B, S, D = 2, 8, 32  # batch, sequence, d_model

    key = jax.random.PRNGKey(0)
    kx, kw, kb = jax.random.split(key, 3)

    x = jax.random.normal(kx, (B, S, D), dtype=jnp.float32)
    # nn.Linear(d_model, 1): weight (1, d_model), bias (1,)
    bound = 1.0 / (D ** 0.5)
    w = jax.random.uniform(kw, (1, D), minval=-bound, maxval=bound, dtype=jnp.float32)
    b = jax.random.uniform(kb, (1,), minval=-bound, maxval=bound, dtype=jnp.float32)

    pooled, attn_w = attention_pooling(x, w, b, return_weights=True)
    pooled_only = attention_pooling(x, w, b, return_weights=False)
    pooled = jax.block_until_ready(pooled)
    attn_w = jax.block_until_ready(attn_w)
    pooled_only = jax.block_until_ready(pooled_only)

    pooled_ref, attn_ref = attention_pooling_ref(x, w, b)
    assert pooled.shape == (B, D)
    assert attn_w.shape == (B, S, 1)
    assert pooled_only.shape == (B, D)
    assert jnp.allclose(pooled, pooled_ref, atol=1e-5, rtol=1e-5)
    assert jnp.allclose(attn_w, attn_ref, atol=1e-5, rtol=1e-5)
    assert jnp.allclose(pooled_only, pooled_ref, atol=1e-5, rtol=1e-5)

    print("KERNEL_OK")
</pallas_src>

<mosaic_0001>
module attributes {stable_mosaic.version = 11 : i64} {
  func.func @_attention_pooling_kernel(%arg0: i32, %arg1: memref<2x8x128xf32, #tpu.memory_space<vmem>>, %arg2: memref<1x128xf32, #tpu.memory_space<vmem>>, %arg3: memref<1x1xf32, #tpu.memory_space<smem>>, %arg4: memref<2x128xf32, #tpu.memory_space<vmem>>, %arg5: memref<2x8xf32, #tpu.memory_space<vmem>>) attributes {dimension_semantics = [#tpu.dimension_semantics<parallel>], iteration_bounds = array<i64: 1>, scalar_prefetch = 0 : i64, scratch_operands = 0 : i64, tpu.core_type = #tpu.core_type<tc>, window_params = [{transform_indices = @transform_0, window_bounds = array<i64: 2, 8, 128>}, {pipeline_mode = #tpu.pipeline_mode<synchronous>, transform_indices = @transform_1, window_bounds = array<i64: 1, 128>}, {transform_indices = @transform_2, window_bounds = array<i64: 1, 1>}, {transform_indices = @transform_3, window_bounds = array<i64: 2, 128>}, {transform_indices = @transform_4, window_bounds = array<i64: 2, 8>}]} {
    %c0 = arith.constant 0 : index
    %c0_0 = arith.constant 0 : index
    %c0_1 = arith.constant 0 : index
    %0 = vector.load %arg1[%c0, %c0_0, %c0_1] : memref<2x8x128xf32, #tpu.memory_space<vmem>>, vector<2x8x128xf32>
    %c0_2 = arith.constant 0 : index
    %c0_3 = arith.constant 0 : index
    %1 = vector.load %arg2[%c0_2, %c0_3] : memref<1x128xf32, #tpu.memory_space<vmem>>, vector<1x128xf32>
    %c0_4 = arith.constant 0 : index
    %c0_5 = arith.constant 0 : index
    %2 = memref.load %arg3[%c0_4, %c0_5] : memref<1x1xf32, #tpu.memory_space<smem>>
    %3 = vector.shape_cast %1 : vector<1x128xf32> to vector<1x1x128xf32>
    %4 = vector.broadcast %3 : vector<1x1x128xf32> to vector<2x8x128xf32>
    %5 = arith.mulf %0, %4 : vector<2x8x128xf32>
    %cst = arith.constant dense<0.000000e+00> : vector<2x8xf32>
    %6 = vector.multi_reduction <add>, %5, %cst [2] : vector<2x8x128xf32> to vector<2x8xf32>
    %7 = vector.broadcast %2 : f32 to vector<2x8xf32>
    %8 = arith.addf %6, %7 : vector<2x8xf32>
    %cst_6 = arith.constant dense<0xFF800000> : vector<2xf32>
    %9 = vector.multi_reduction <maximumf>, %8, %cst_6 [1] : vector<2x8xf32> to vector<2xf32>
    %10 = vector.shape_cast %9 : vector<2xf32> to vector<2x1xf32>
    %11 = vector.broadcast %10 : vector<2x1xf32> to vector<2x8xf32>
    %12 = arith.subf %8, %11 : vector<2x8xf32>
    %13 = math.exp %12 : vector<2x8xf32>
    %cst_7 = arith.constant dense<0.000000e+00> : vector<2xf32>
    %14 = vector.multi_reduction <add>, %13, %cst_7 [1] : vector<2x8xf32> to vector<2xf32>
    %15 = vector.shape_cast %14 : vector<2xf32> to vector<2x1xf32>
    %16 = vector.broadcast %15 : vector<2x1xf32> to vector<2x8xf32>
    %17 = arith.divf %13, %16 : vector<2x8xf32>
    %18 = vector.shape_cast %17 : vector<2x8xf32> to vector<2x8x1xf32>
    %19 = vector.broadcast %18 : vector<2x8x1xf32> to vector<2x8x128xf32>
    %20 = arith.mulf %0, %19 : vector<2x8x128xf32>
    %cst_8 = arith.constant dense<0.000000e+00> : vector<2x128xf32>
    %21 = vector.multi_reduction <add>, %20, %cst_8 [1] : vector<2x8x128xf32> to vector<2x128xf32>
    %c0_9 = arith.constant 0 : index
    %c0_10 = arith.constant 0 : index
    %22 = vector.load %arg4[%c0_9, %c0_10] : memref<2x128xf32, #tpu.memory_space<vmem>>, vector<2x128xf32>
    tpu.vector_store %arg4[%c0_9, %c0_10], %21 {strides = array<i32>} : memref<2x128xf32, #tpu.memory_space<vmem>>, vector<2x128xf32>,
    %c0_11 = arith.constant 0 : index
    %c0_12 = arith.constant 0 : index
    %23 = vector.load %arg5[%c0_11, %c0_12] : memref<2x8xf32, #tpu.memory_space<vmem>>, vector<2x8xf32>
    tpu.vector_store %arg5[%c0_11, %c0_12], %17 {strides = array<i32>} : memref<2x8xf32, #tpu.memory_space<vmem>>, vector<2x8xf32>,
    return
  }
  func.func @transform_0(%arg0: i32) -> (i32, i32, i32) {
    %c0_i32 = arith.constant 0 : i32
    %c0_i32_0 = arith.constant 0 : i32
    %c0_i32_1 = arith.constant 0 : i32
    return %arg0, %c0_i32, %c0_i32_0 : i32, i32, i32
  }
  func.func @transform_1(%arg0: i32) -> (i32, i32) {
    %c0_i32 = arith.constant 0 : i32
    %c0_i32_0 = arith.constant 0 : i32
    %c0_i32_1 = arith.constant 0 : i32
    return %c0_i32, %c0_i32_0 : i32, i32
  }
  func.func @transform_2(%arg0: i32) -> (i32, i32) {
    %c0_i32 = arith.constant 0 : i32
    %c0_i32_0 = arith.constant 0 : i32
    %c0_i32_1 = arith.constant 0 : i32
    return %c0_i32, %c0_i32_0 : i32, i32
  }
  func.func @transform_3(%arg0: i32) -> (i32, i32) {
    %c0_i32 = arith.constant 0 : i32
    %c0_i32_0 = arith.constant 0 : i32
    return %arg0, %c0_i32 : i32, i32
  }
  func.func @transform_4(%arg0: i32) -> (i32, i32) {
    %c0_i32 = arith.constant 0 : i32
    %c0_i32_0 = arith.constant 0 : i32
    return %arg0, %c0_i32 : i32, i32
  }
}

</mosaic_0001>

<llo_original>
// kernel: tpu_custom_call.1
$region0: #{tpu_custom_call.1}
  #allocation0 [shape = 'u32[]', space=smem, size = 0x4, offset = 0x4, fixed_abs, tag = 'smem constant byte address 0x4 - core index']
  #allocation1 [shape = 'u32[144,128]{1,0:T(1,128)}', space=vmem, size = 0x12000, scoped, tag = 'internal scratch']
  #allocation2 [shape = 'f32[1,1]{1,0:T(1,128)S(6)}', space=smem, size = 0x200, scoped, tag = 'scoped memory for tpu_custom_call.1']
  %s0 = inlined_call_operand.hbm [shape: f32[2,8,128], index: 0, kind: input, shape index: {}]
  %s1 = inlined_call_operand.vmem [shape: f32[1,128], index: 1, kind: input, shape index: {}]
  %s2 = inlined_call_operand.<no memory space> [shape: f32[1,1], index: 2, kind: input, shape index: {}]
  %s3 = inlined_call_operand.hbm [shape: f32[2,128], index: 3, kind: output, shape index: {0}]
  %s4 = inlined_call_operand.hbm [shape: f32[2,8], index: 4, kind: output, shape index: {1}]
  %5 = xla_tuple %s3, %s4
  %s6 = sld [smem:[#allocation0]]
  $region34: #{tpu_custom_call.1} parent=0
    _
  %s8 = ssub.s32 1, %s6
  %s9 = scalar_select 0, %s8, %s6
  %10 = sst [smem:[#allocation2]] %s2
  $region1: #{tpu_custom_call.1} parent=0
    #allocation3 [shape = 'u8[8192]{0}', space=vmem, size = 0x2000, scoped, tag = 'input window, operand 0, single buffered']
    #allocation4 [shape = 's32[1]{0}', space=sflag, size = 0x4, scoped, tag = 'scoped memory for tpu_custom_call.1']
    #allocation5 [shape = 's32[1]{0}', space=sflag, size = 0x4, scoped, tag = 'scoped memory for tpu_custom_call.1']
    #allocation6 [shape = 'u8[1024]{0}', space=vmem, size = 0x400, scoped, tag = 'output window, operand 0, single buffered']
    #allocation7 [shape = 'u8[1024]{0}', space=vmem, size = 0x400, scoped, tag = 'output window, operand 1, single buffered']
    #allocation8 [shape = 's32[1]{0}', space=sflag, size = 0x4, scoped, tag = 'scoped memory for tpu_custom_call.1']
    %11 = vsyncpa [#allocation4], 0
    %12 = vsyncpa [#allocation5], 0
    %13 = vsyncpa [#allocation8], 0
    // Predicated region
    $region2: #{tpu_custom_call.1} parent=1 // pred_check
      _
    $region3: #{tpu_custom_call.1} parent=1 // pred_check_branch
      %15 = sbr.rel (0) target = $region5
    $region4: #{tpu_custom_call.1} parent=1 // pred_region
      %s17 = ssub.s32 256, 256
      %18 = vsyncadd [#allocation4], %s17
      %s19 = sshll.u32 [#allocation3], 4
      %s20 = int_to_ptr.vmem [resolvable:$true] %s19
      %25 = dma.hbm_to_vmem [thread:$0]  %s0, 256, %s20, [#allocation4], 128, 128, 8
    $region5: #{tpu_custom_call.1} parent=1 // pred_fallthru
      _
    // Predicated region
    $region6: #{tpu_custom_call.1} parent=1 // pred_check
      _
    $region7: #{tpu_custom_call.1} parent=1 // pred_check_branch
      %27 = sbr.rel (0) target = $region9
    $region8: #{tpu_custom_call.1} parent=1 // pred_region
      _
    $region9: #{tpu_custom_call.1} parent=1 // pred_fallthru
      _
    // Predicated region
    $region10: #{tpu_custom_call.1} parent=1 // pred_check
      _
    $region11: #{tpu_custom_call.1} parent=1 // pred_check_branch
      %29 = sbr.rel (0) target = $region13
    $region12: #{tpu_custom_call.1} parent=1 // pred_region
      _
    $region13: #{tpu_custom_call.1} parent=1 // pred_fallthru
      _
    // Predicated region
    $region14: #{tpu_custom_call.1} parent=1 // pred_check
      _
    $region15: #{tpu_custom_call.1} parent=1 // pred_check_branch
      %31 = sbr.rel (0) target = $region17
    $region16: #{tpu_custom_call.1} parent=1 // pred_region
      %32 = dma.done [#allocation4], 256
    $region17: #{tpu_custom_call.1} parent=1 // pred_fallthru
      _
    %v33 = vld [vmem:[#allocation3] sm:$0xff]
    %v34 = vld [vmem:[#allocation3 + $0x8] sm:$0xff]
    %v35 = vld [vmem:[%s1] sm:$0x1]
    %s36 = sld [smem:[#allocation2]]
    %v38 = vlaneseq
    %v39 = vshrl.u32 %v38, 7
    %v40 = vsub.s32 0, %v39
    %v41 = vrot.slane %v35, %v40
    %v43 = vmul.f32 %v33, %v41
    %v44 = vmul.f32 %v34, %v41
    %45 = vadd.xlane.f32.xlu0 %v43
    %v46 = vpop.xlane.xlu0 %45
    %47 = vadd.xlane.f32.xlu0 %v44
    %v48 = vpop.xlane.xlu0 %47
    %v49 = vstv %s36
    %v50 = vadd.f32 %v46, %v49
    %v51 = vadd.f32 %v48, %v49
    %v54 = vlaneseq
    %v55 = vand.u32 %v54, 127
    %v56 = vlaneseq
    %v57 = vshrl.u32 %v56, 7
    %v58 = vsub.s32 %v55, %v57
    %v59 = vrot.slane %v50, %v58
    %v60 = vlaneseq
    %v61 = vshrl.u32 %v60, 7
    %v62 = vsub.s32 %v55, %v61
    %v63 = vrot.slane %v51, %v62
    %vm64 = vcmask 1041409
    %v65 = vsel %vm64, %v63, %v59
    %vm67 = vcmask 58368
    %v68 = vsel %vm67, %v65, -inf
    %69 = vmax.xlane.f32.xlu0 %v68
    %v70 = vpop.xlane.xlu0 %69
    %v72 = vlaneseq
    %v73 = vshrl.u32 %v72, 7
    %v74 = vsub.s32 0, %v73
    %v75 = vrot.slane %v70, %v74
    %v76 = vlaneseq
    %v77 = vshrl.u32 %v76, 7
    %v78 = vsub.s32 1, %v77
    %v79 = vrot.slane %v70, %v78
    %v82 = vsub.f32 %v50, %v75
    %v83 = vsub.f32 %v51, %v79
    %v84 = vmul.f32 %v82, 1.442695
    %v85 = vpow.pop %v84
    %v86 = vmul.f32 %v83, 1.442695
    %v87 = vpow.pop %v86
    %90 = vset.pattern.permute.xlu0 0
    %91 = vperm.xlu0 %90, %v85
    %v92 = vpop.permute.xlu0 %91
    %93 = vset.pattern.permute.xlu0 0
    %94 = vperm.xlu0 %93, %v87
    %v95 = vpop.permute.xlu0 %94
    %v96 = vlaneseq
    %v97 = vshrl.u32 %v96, 7
    %v98 = vsub.s32 %v55, %v97
    %v99 = vrot.slane %v92, %v98
    %v100 = vlaneseq
    %v101 = vshrl.u32 %v100, 7
    %v102 = vsub.s32 %v55, %v101
    %v103 = vrot.slane %v95, %v102
    %v104 = vsel %vm64, %v103, %v99
    %v106 = vsel %vm67, %v104, 0.0
    %107 = vadd.xlane.f32.xlu0 %v106
    %v108 = vpop.xlane.xlu0 %107
    %v110 = vlaneseq
    %v111 = vshrl.u32 %v110, 7
    %v112 = vsub.s32 0, %v111
    %v113 = vrot.slane %v108, %v112
    %v114 = vlaneseq
    %v115 = vshrl.u32 %v114, 7
    %v116 = vsub.s32 1, %v115
    %v117 = vrot.slane %v108, %v116
    %v120 = vrcp.pop %v113
    %v121 = vmul.f32 %v85, %v120
    %v122 = vrcp.pop %v117
    %v123 = vmul.f32 %v87, %v122
    %125 = vset.pattern.permute.xlu0 0
    %126 = vperm.xlu0 %125, %v121
    %v127 = vpop.permute.xlu0 %126
    %130 = vset.pattern.permute.xlu0 0
    %131 = vperm.xlu0 %130, %v123
    %v132 = vpop.permute.xlu0 %131
    %v134 = vmul.f32 %v33, %v127
    %v135 = vmul.f32 %v34, %v132
    %v136 = vrot.slane %v134, 4
    %v137 = vadd.f32 %v134, %v136
    %v138 = vrot.slane %v137, 2
    %v139 = vadd.f32 %v137, %v138
    %v140 = vrot.slane %v139, 1
    %v141 = vadd.f32 %v139, %v140
    %v142 = vrot.slane %v135, 4
    %v143 = vadd.f32 %v135, %v142
    %v144 = vrot.slane %v143, 2
    %v145 = vadd.f32 %v143, %v144
    %v146 = vrot.slane %v145, 1
    %v147 = vadd.f32 %v145, %v146
    %v150 = vsel %vm64, %v147, %v141
    %152 = vst [vmem:[#allocation6] sm:$0x3] %v150
    %v153 = vlaneseq
    %v154 = vshrl.u32 %v153, 7
    %v155 = vsub.s32 %v55, %v154
    %v156 = vrot.slane %v127, %v155
    %v157 = vlaneseq
    %v158 = vshrl.u32 %v157, 7
    %v159 = vsub.s32 %v55, %v158
    %v160 = vrot.slane %v132, %v159
    %v161 = vsel %vm64, %v160, %v156
    %163 = vst.msk [vmem:[#allocation7] sm:$0x3] %vm67, %v161
    // Predicated region
    $region18: #{tpu_custom_call.1} parent=1 // pred_check
      _
    $region19: #{tpu_custom_call.1} parent=1 // pred_check_branch
      %165 = sbr.rel (0) target = $region21
    $region20: #{tpu_custom_call.1} parent=1 // pred_region
      %s167 = ssub.s32 32, 32
      %168 = vsyncadd [#allocation5], %s167
      %s170 = sshll.u32 [#allocation6], 4
      %s171 = int_to_ptr.vmem [resolvable:$true] %s170
      %173 = dma.vmem_to_hbm [thread:$0]  %s171, 32, %s3, [#allocation5]
    $region21: #{tpu_custom_call.1} parent=1 // pred_fallthru
      _
    // Predicated region
    $region22: #{tpu_custom_call.1} parent=1 // pred_check
      _
    $region23: #{tpu_custom_call.1} parent=1 // pred_check_branch
      %175 = sbr.rel (0) target = $region25
    $region24: #{tpu_custom_call.1} parent=1 // pred_region
      %s177 = ssub.s32 32, 32
      %178 = vsyncadd [#allocation8], %s177
      %s180 = sshll.u32 [#allocation7], 4
      %s181 = int_to_ptr.vmem [resolvable:$true] %s180
      %183 = dma.vmem_to_hbm [thread:$0]  %s181, 32, %s4, [#allocation8]
    $region25: #{tpu_custom_call.1} parent=1 // pred_fallthru
      _
    // Predicated region
    $region26: #{tpu_custom_call.1} parent=1 // pred_check
      _
    $region27: #{tpu_custom_call.1} parent=1 // pred_check_branch
      %185 = sbr.rel (0) target = $region29
    $region28: #{tpu_custom_call.1} parent=1 // pred_region
      %186 = dma.done [#allocation5], 32
    $region29: #{tpu_custom_call.1} parent=1 // pred_fallthru
      _
    // Predicated region
    $region30: #{tpu_custom_call.1} parent=1 // pred_check
      _
    $region31: #{tpu_custom_call.1} parent=1 // pred_check_branch
      %188 = sbr.rel (0) target = $region33
    $region32: #{tpu_custom_call.1} parent=1 // pred_region
      %189 = dma.done [#allocation8], 32
    $region33: #{tpu_custom_call.1} parent=1 // pred_fallthru
      _
    %190 = vsyncpa [#allocation4], 1
    %191 = vsyncpa [#allocation5], 1
    %192 = vsyncpa [#allocation8], 1

</llo_original>
